<compile_context>
chip_gen: v7x
topology: tpu7x:2x2x1
jax: 0.10.0
libtpu: 0.0.40
codegen_flags: <defaults>
</compile_context>

<pallas_src>
import functools

import jax
import jax.numpy as jnp
from jax.experimental import pallas as pl
from jax.experimental.pallas import tpu as pltpu


def _round_up(x, m):
    return ((x + m - 1) // m) * m


def _vmem_limit(need_bytes):
    """Scoped-VMEM limit: 2x the working set, clamped to [32 MiB, 96 MiB].

    32 MiB is the default (zero-risk no-op at small shapes); 96 MiB leaves
    headroom on v5e/v6e's 128 MiB and is never requested unless the working
    set actually needs it.  On v7x (64 MiB physical) large-hidden configs
    should also cap the spatial tile near 512 rows (see tile_s below)."""
    return int(min(96 * 1024 * 1024, max(32 * 1024 * 1024, 2 * need_bytes)))


# -----------------------------------------------------------------------------
# Kernel A: fused feature tower + global average pool.
# Grid = (B, S_pad // TS).  Per step:
#   stem = SiLU(cols_tile @ Wstem_folded + bstem)     (conv3x3/s2 + folded BN)
#   proj = SiLU(stem @ Wproj_folded + bproj)          (conv1x1     + folded BN)
#   acc8 += sublane-grouped partial sums of proj      (VPU-only adds)
# Finalize (last spatial tile): single XLU reduce of acc8, subtract the
# constant padded-row contribution, scale by 1/S, write the (1,1,hidden) block.
# NOTE: the output block index does not depend on the spatial-tile axis, so
# that axis MUST stay last in the grid and be marked "arbitrary".
# -----------------------------------------------------------------------------
def _fused_feature_kernel(cols_ref, wstem_ref, bstem_ref, wproj_ref, bproj_ref,
                          padcorr_ref, pooled_ref, acc_ref, *, inv_s):
    t = pl.program_id(1)

    @pl.when(t == 0)
    def _init():
        acc_ref[...] = jnp.zeros_like(acc_ref)

    cols = cols_ref[0]                                           # (TS, K9) bf16
    z = jnp.dot(cols, wstem_ref[...],
                preferred_element_type=jnp.float32) + bstem_ref[...]
    stem = z * jax.nn.sigmoid(z)                                 # SiLU (EUP)

    z2 = jnp.dot(stem.astype(jnp.bfloat16), wproj_ref[...],
                 preferred_element_type=jnp.float32) + bproj_ref[...]
    proj = z2 * jax.nn.sigmoid(z2)                               # (TS, hidden) f32

    ts, hidden = proj.shape
    # Partial pool: reshape (TS, hidden) -> (TS//8, 8, hidden) is a pure
    # major-dim split (trailing dims stay (8, hidden)); the axis-0 sum is plain
    # vreg adds on the VPU.  No per-step cross-sublane reduce, no padding mask.
    acc_ref[...] += proj.reshape(ts // 8, 8, hidden).sum(axis=0)

    @pl.when(t == pl.num_programs(1) - 1)
    def _finalize():
        total = jnp.sum(acc_ref[...], axis=0, keepdims=True)     # (1, hidden)
        total = total - padcorr_ref[...]          # remove zero-padded-row term
        pooled_ref[...] = (total * inv_s).reshape(1, 1, hidden)


def fused_features(cols, wstem, bstem, wproj, bproj, padcorr, *, s_valid, ts):
    """cols: (B, S_pad, K9) bf16; conv weights bf16 (BN scale folded);
    biases / padcorr f32.  Returns pooled features (B, hidden) f32."""
    B, S_pad, K9 = cols.shape
    Cs = wstem.shape[1]
    hidden = wproj.shape[1]
    n_t = S_pad // ts

    flops = int(2 * B * S_pad * (K9 * Cs + Cs * hidden))
    bytes_accessed = int(cols.size * 2 + wstem.size * 2 + wproj.size * 2
                         + (bstem.size + bproj.size + padcorr.size) * 4
                         + B * hidden * 4)
    # Working set: double-buffered cols tile + resident weights/biases +
    # f32 activation temporaries + output block + scratch.
    work = (2 * ts * K9 * 2 + K9 * Cs * 2 + Cs * hidden * 2
            + (Cs + 3 * hidden) * 4 + ts * (Cs + hidden) * 4
            + hidden * 4 + 8 * hidden * 4)

    kern = functools.partial(_fused_feature_kernel, inv_s=1.0 / s_valid)
    pooled = pl.pallas_call(
        kern,
        out_shape=jax.ShapeDtypeStruct((B, 1, hidden), jnp.float32),
        grid=(B, n_t),
        in_specs=[
            pl.BlockSpec((1, ts, K9), lambda b, t: (b, t, 0)),    # streamed
            pl.BlockSpec((K9, Cs), lambda b, t: (0, 0)),          # resident
            pl.BlockSpec((1, Cs), lambda b, t: (0, 0)),           # resident
            pl.BlockSpec((Cs, hidden), lambda b, t: (0, 0)),      # resident
            pl.BlockSpec((1, hidden), lambda b, t: (0, 0)),       # resident
            pl.BlockSpec((1, hidden), lambda b, t: (0, 0)),       # resident
        ],
        out_specs=pl.BlockSpec((1, 1, hidden), lambda b, t: (b, 0, 0)),
        scratch_shapes=[pltpu.VMEM((8, hidden), jnp.float32)],
        # Batch axis feeds megacore (v7x).  For B == 1 inference, sharding the
        # spatial axis instead (two partial accumulators) would be preferable.
        compiler_params=pltpu.CompilerParams(
            dimension_semantics=("parallel", "arbitrary"),
            vmem_limit_bytes=_vmem_limit(work)),
        cost_estimate=pl.CostEstimate(
            flops=flops,
            transcendentals=int(B * S_pad * (Cs + hidden)),
            bytes_accessed=bytes_accessed),
    )(cols, wstem, bstem, wproj, bproj, padcorr)
    return pooled.reshape(B, hidden)


# -----------------------------------------------------------------------------
# Kernel B: classifier head.
#   out = feat @ Wf + b                      (include_label == 0)
#   out = feat @ Wf + b + one_hot(y) @ Wl    (include_label  > 0)
# Tiled over batch; weights / bias resident; output lane-dense (C padded to a
# multiple of 128).  y travels as a tiny (tb, 1) int32 block, so no (B, C)
# f32 "add" array is ever written to / read from HBM.
# -----------------------------------------------------------------------------
def _head_kernel(feat_ref, wf_ref, b_ref, o_ref):
    o_ref[...] = (jnp.dot(feat_ref[...], wf_ref[...],
                          preferred_element_type=jnp.float32) + b_ref[...])


def _head_kernel_label(y_ref, feat_ref, wf_ref, wl_ref, b_ref, o_ref):
    out = jnp.dot(feat_ref[...], wf_ref[...],
                  preferred_element_type=jnp.float32) + b_ref[...]
    tb = out.shape[0]
    lp = wl_ref.shape[0]
    onehot = (y_ref[...] ==
              jax.lax.broadcasted_iota(jnp.int32, (tb, lp), 1)
              ).astype(jnp.float32)                                # (tb, Lp)
    out = out + jnp.dot(onehot, wl_ref[...],
                        preferred_element_type=jnp.float32)        # MXU, tiny K
    o_ref[...] = out


def head_fc(feat, wf, fcb, wl=None, y=None, *, tile_b=256):
    """feat (B, Hf) bf16, wf (Hf, Cp) bf16, fcb (1, Cp) f32,
    wl (Lp, Cp) f32 or None, y (B,) int or None.  Returns (B_pad, Cp) f32."""
    B, Hf = feat.shape
    Cp = wf.shape[1]
    tb = max(1, min(tile_b, B))
    B_pad = pl.cdiv(B, tb) * tb
    if B_pad != B:
        feat = jnp.pad(feat, ((0, B_pad - B), (0, 0)))

    work = 2 * tb * Hf * 2 + Hf * Cp * 2 + Cp * 4 + 2 * tb * Cp * 4
    params = pltpu.CompilerParams(dimension_semantics=("parallel",),
                                  vmem_limit_bytes=_vmem_limit(work))

    if wl is None:
        return pl.pallas_call(
            _head_kernel,
            out_shape=jax.ShapeDtypeStruct((B_pad, Cp), jnp.float32),
            grid=(B_pad // tb,),
            in_specs=[pl.BlockSpec((tb, Hf), lambda i: (i, 0)),
                      pl.BlockSpec((Hf, Cp), lambda i: (0, 0)),
                      pl.BlockSpec((1, Cp), lambda i: (0, 0))],
            out_specs=pl.BlockSpec((tb, Cp), lambda i: (i, 0)),
            compiler_params=params,
        )(feat, wf, fcb)

    y2 = y.astype(jnp.int32).reshape(B, 1)
    if B_pad != B:
        y2 = jnp.pad(y2, ((0, B_pad - B), (0, 0)))
    Lp = wl.shape[0]
    return pl.pallas_call(
        _head_kernel_label,
        out_shape=jax.ShapeDtypeStruct((B_pad, Cp), jnp.float32),
        grid=(B_pad // tb,),
        in_specs=[pl.BlockSpec((tb, 1), lambda i: (i, 0)),        # y (tiny)
                  pl.BlockSpec((tb, Hf), lambda i: (i, 0)),
                  pl.BlockSpec((Hf, Cp), lambda i: (0, 0)),
                  pl.BlockSpec((Lp, Cp), lambda i: (0, 0)),
                  pl.BlockSpec((1, Cp), lambda i: (0, 0))],
        out_specs=pl.BlockSpec((tb, Cp), lambda i: (i, 0)),
        compiler_params=params,
    )(y2, feat, wf, wl, fcb)


# -----------------------------------------------------------------------------
# JAX glue: im2col for the 3x3 / stride-2 / pad-1 stem conv (slicing only).
# Input already bf16, so the only materialized array is bf16.
# -----------------------------------------------------------------------------
def im2col(x_nhwc, kh, kw, stride, pad):
    B, H, W, C = x_nhwc.shape
    xp = jnp.pad(x_nhwc, ((0, 0), (pad, pad), (pad, pad), (0, 0)))
    Ho = (H + 2 * pad - kh) // stride + 1
    Wo = (W + 2 * pad - kw) // stride + 1
    patches = []
    for i in range(kh):
        for j in range(kw):
            patches.append(xp[:, i:i + stride * Ho:stride,
                               j:j + stride * Wo:stride, :])
    cols = jnp.concatenate(patches, axis=-1)               # (B, Ho, Wo, kh*kw*C)
    return cols.reshape(B, Ho * Wo, kh * kw * C), Ho, Wo


# -----------------------------------------------------------------------------
# Full forward (mirrors _efficientnet_base.forward).  include_label is a static
# module config (Python int), so the Python branch matches the PyTorch module.
# -----------------------------------------------------------------------------
def efficientnet_base_forward(params, x_nchw, y, include_label, *,
                              tile_s=1024, tile_b=256):
    # Cast to bf16 BEFORE pad / im2col so the stem operand never exists in f32
    # in HBM (perf review item); values identical to casting the cols after.
    x = jnp.transpose(x_nchw, (0, 2, 3, 1)).astype(jnp.bfloat16)   # NCHW->NHWC
    B = x.shape[0]

    # Feature tower (stand-in): stem 3x3/s2 Conv+BN+SiLU, 1x1 proj Conv+BN+SiLU.
    cols, Ho, Wo = im2col(x, 3, 3, 2, 1)                           # (B, S, 9*Cin)
    S = Ho * Wo

    # Spatial tile: multiple of 8 sublanes, <= S.  Default 1024 rows halves
    # grid-step overhead on v5e/v6e (128 MiB VMEM); on v7x (64 MiB) cap near
    # 512 when hidden is large (proj f32 temp is ts*hidden*4 bytes).
    ts = max(8, (min(tile_s, S) // 8) * 8)
    S_pad = pl.cdiv(S, ts) * ts
    if S_pad != S:
        cols = jnp.pad(cols, ((0, 0), (0, S_pad - S), (0, 0)))

    # Fold BN scale into the conv weights:  (x @ w) * s + b == x @ (w * s) + b.
    wstem = (params["stem_w"] * params["stem_scale"]).astype(jnp.bfloat16)
    wproj = (params["proj_w"] * params["proj_scale"]).astype(jnp.bfloat16)
    bstem = params["stem_bias"]
    bproj = params["proj_bias"]

    # Constant contribution of one zero-padded spatial row (cols row == 0):
    # SiLU(SiLU(bstem) @ wproj + bproj), times the number of padded rows.
    # Subtracted once in the kernel's finalize branch — no per-step mask.
    n_pad = S_pad - S
    stem0 = bstem * jax.nn.sigmoid(bstem)                          # (1, Cs)
    z0 = jnp.dot(stem0.astype(jnp.bfloat16), wproj,
                 preferred_element_type=jnp.float32) + bproj
    padcorr = float(n_pad) * (z0 * jax.nn.sigmoid(z0))             # (1, hidden)

    feat = fused_features(cols, wstem, bstem, wproj, bproj, padcorr,
                          s_valid=S, ts=ts)                        # (B, hidden)

    # nn.Dropout(p, inplace=True) is identity in eval mode.
    # Classifier: [feat, one_hot(y)] @ W^T + b == feat @ Wf + one_hot(y)@Wl + b,
    # with the bias + label term applied inside the head kernel.
    C = params["fc_wf"].shape[1]
    Cp = _round_up(C, 128)              # lane-dense output slab (unmasked vst)
    wf = jnp.pad(params["fc_wf"], ((0, 0), (0, Cp - C))).astype(jnp.bfloat16)
    fcb = jnp.pad(params["fc_b"], ((0, 0), (0, Cp - C)))
    if include_label > 0:
        L = params["fc_wl"].shape[0]
        Lp = _round_up(L, 8)
        wl = jnp.pad(params["fc_wl"], ((0, Lp - L), (0, Cp - C)))
        out = head_fc(feat.astype(jnp.bfloat16), wf, fcb, wl=wl, y=y,
                      tile_b=tile_b)
    else:
        out = head_fc(feat.astype(jnp.bfloat16), wf, fcb, tile_b=tile_b)
    return out[:B, :C]


# -----------------------------------------------------------------------------
# References for validation.
# -----------------------------------------------------------------------------
def reference_forward_precise(params, x_nchw, y, include_label):
    """Pure-JAX reference using the same bf16/f32 numerics as the kernels."""
    x = jnp.transpose(x_nchw, (0, 2, 3, 1)).astype(jnp.bfloat16)
    cols, _, _ = im2col(x, 3, 3, 2, 1)
    wstem = (params["stem_w"] * params["stem_scale"]).astype(jnp.bfloat16)
    wproj = (params["proj_w"] * params["proj_scale"]).astype(jnp.bfloat16)
    z = jnp.dot(cols, wstem, preferred_element_type=jnp.float32) + params["stem_bias"]
    stem = z * jax.nn.sigmoid(z)
    z2 = jnp.dot(stem.astype(jnp.bfloat16), wproj,
                 preferred_element_type=jnp.float32) + params["proj_bias"]
    proj = z2 * jax.nn.sigmoid(z2)
    feat = proj.mean(axis=1)
    out = jnp.dot(feat.astype(jnp.bfloat16),
                  params["fc_wf"].astype(jnp.bfloat16),
                  preferred_element_type=jnp.float32) + params["fc_b"]
    if include_label > 0:
        out = out + jnp.take(params["fc_wl"], y.astype(jnp.int32), axis=0)
    return out


def reference_forward_f32(params, x_nchw, y, include_label):
    """PyTorch-faithful pure-f32 semantics (concat + one_hot + single Linear)."""
    x = jnp.transpose(x_nchw, (0, 2, 3, 1)).astype(jnp.float32)
    cols, _, _ = im2col(x, 3, 3, 2, 1)

    def conv_bn_silu(a, w, s, b):
        z = a @ w * s + b
        return z * jax.nn.sigmoid(z)

    stem = conv_bn_silu(cols, params["stem_w"], params["stem_scale"],
                        params["stem_bias"])
    proj = conv_bn_silu(stem, params["proj_w"], params["proj_scale"],
                        params["proj_bias"])
    feat = proj.mean(axis=1)
    if include_label > 0:
        onehot = jax.nn.one_hot(y, include_label, dtype=jnp.float32)
        xcat = jnp.concatenate([feat, onehot], axis=1)
        Wfull = jnp.concatenate([params["fc_wf"], params["fc_wl"]], axis=0)
        return xcat @ Wfull + params["fc_b"]
    return feat @ params["fc_wf"] + params["fc_b"]


if __name__ == "__main__":
    # Small shapes consistent with the module's forward.
    B, Cin, H, W = 2, 3, 16, 16
    C_stem, hidden = 8, 128          # hidden kept lane-dense (multiple of 128)
    include_label, num_classes = 4, 5

    key = jax.random.PRNGKey(0)
    ks = jax.random.split(key, 10)

    params = {
        "stem_w":     0.1 * jax.random.normal(ks[0], (3 * 3 * Cin, C_stem), jnp.float32),
        "stem_scale": 1.0 + 0.1 * jax.random.normal(ks[1], (1, C_stem), jnp.float32),
        "stem_bias":  0.1 * jax.random.normal(ks[2], (1, C_stem), jnp.float32),
        "proj_w":     0.1 * jax.random.normal(ks[3], (C_stem, hidden), jnp.float32),
        "proj_scale": 1.0 + 0.1 * jax.random.normal(ks[4], (1, hidden), jnp.float32),
        "proj_bias":  0.1 * jax.random.normal(ks[5], (1, hidden), jnp.float32),
        # fc: Linear(hidden + include_label, num_classes) stored as W^T split.
        "fc_wf": 0.1 * jax.random.normal(ks[6], (hidden, num_classes), jnp.float32),
        "fc_wl": 0.1 * jax.random.normal(ks[7], (include_label, num_classes), jnp.float32),
        "fc_b":  0.1 * jax.random.normal(ks[8], (1, num_classes), jnp.float32),
    }

    x = jax.random.normal(ks[9], (B, Cin, H, W), jnp.float32)   # NCHW like PyTorch
    y = jnp.array([1, 3], dtype=jnp.int32)

    # tile_s=48 forces two spatial tiles per image (S = 8*8 = 64): exercises
    # the accumulate path and the padded-row finalize correction.
    out = efficientnet_base_forward(params, x, y, include_label, tile_s=48)
    out = jax.block_until_ready(out)
    assert out.shape == (B, num_classes)

    ref_p = reference_forward_precise(params, x, y, include_label)
    assert jnp.allclose(out, ref_p, atol=2e-3, rtol=2e-3), (out, ref_p)

    ref_f = reference_forward_f32(params, x, y, include_label)
    assert jnp.allclose(out, ref_f, atol=5e-2, rtol=5e-2), (out, ref_f)

    # Default tile size (single spatial tile, zero padded rows).
    out_big = efficientnet_base_forward(params, x, y, include_label)
    out_big = jax.block_until_ready(out_big)
    assert jnp.allclose(out_big, ref_p, atol=2e-3, rtol=2e-3), (out_big, ref_p)

    # Explicit no-label branch (fc over features only, no one-hot / Wl term).
    out0 = efficientnet_base_forward(params, x, None, 0, tile_s=48)
    out0 = jax.block_until_ready(out0)
    ref0 = reference_forward_f32(params, x, None, 0)
    assert out0.shape == (B, num_classes)
    assert jnp.allclose(out0, ref0, atol=5e-2, rtol=5e-2), (out0, ref0)

    print("KERNEL_OK")
</pallas_src>

<mosaic_0001>
module attributes {stable_mosaic.version = 11 : i64} {
  func.func @_fused_feature_kernel(%arg0: i32, %arg1: i32, %arg2: memref<1x48x27xbf16, #tpu.memory_space<vmem>>, %arg3: memref<27x8xbf16, #tpu.memory_space<vmem>>, %arg4: memref<1x8xf32, #tpu.memory_space<vmem>>, %arg5: memref<8x128xbf16, #tpu.memory_space<vmem>>, %arg6: memref<1x128xf32, #tpu.memory_space<vmem>>, %arg7: memref<1x128xf32, #tpu.memory_space<vmem>>, %arg8: memref<1x1x128xf32, #tpu.memory_space<vmem>>, %arg9: memref<8x128xf32, #tpu.memory_space<vmem>>) attributes {dimension_semantics = [#tpu.dimension_semantics<parallel>, #tpu.dimension_semantics<arbitrary>], iteration_bounds = array<i64: 2, 2>, scalar_prefetch = 0 : i64, scratch_operands = 1 : i64, tpu.core_type = #tpu.core_type<tc>, window_params = [{transform_indices = @transform_0, window_bounds = array<i64: 1, 48, 27>}, {pipeline_mode = #tpu.pipeline_mode<synchronous>, transform_indices = @transform_1, window_bounds = array<i64: 27, 8>}, {pipeline_mode = #tpu.pipeline_mode<synchronous>, transform_indices = @transform_2, window_bounds = array<i64: 1, 8>}, {pipeline_mode = #tpu.pipeline_mode<synchronous>, transform_indices = @transform_3, window_bounds = array<i64: 8, 128>}, {pipeline_mode = #tpu.pipeline_mode<synchronous>, transform_indices = @transform_4, window_bounds = array<i64: 1, 128>}, {pipeline_mode = #tpu.pipeline_mode<synchronous>, transform_indices = @transform_5, window_bounds = array<i64: 1, 128>}, {transform_indices = @transform_6, window_bounds = array<i64: 1, 1, 128>}]} {
    %c0_i32 = arith.constant 0 : i32
    %0 = arith.cmpi eq, %arg1, %c0_i32 : i32
    %1 = arith.extui %0 : i1 to i32
    %c0_i32_0 = arith.constant 0 : i32
    %2 = arith.cmpi ne, %1, %c0_i32_0 : i32
    scf.if %2 {
      %cst_20 = arith.constant 0.000000e+00 : f32
      %36 = vector.broadcast %cst_20 : f32 to vector<8x128xf32>
      %c0_21 = arith.constant 0 : index
      %c0_22 = arith.constant 0 : index
      %37 = vector.load %arg9[%c0_21, %c0_22] : memref<8x128xf32, #tpu.memory_space<vmem>>, vector<8x128xf32>
      tpu.vector_store %arg9[%c0_21, %c0_22], %36 {strides = array<i32>} : memref<8x128xf32, #tpu.memory_space<vmem>>, vector<8x128xf32>,
    } else {
    }
    %c0 = arith.constant 0 : index
    %c0_1 = arith.constant 0 : index
    %c0_2 = arith.constant 0 : index
    %3 = vector.load %arg2[%c0, %c0_1, %c0_2] : memref<1x48x27xbf16, #tpu.memory_space<vmem>>, vector<1x48x27xbf16>
    %4 = vector.shape_cast %3 : vector<1x48x27xbf16> to vector<48x27xbf16>
    %c0_3 = arith.constant 0 : index
    %c0_4 = arith.constant 0 : index
    %5 = vector.load %arg3[%c0_3, %c0_4] : memref<27x8xbf16, #tpu.memory_space<vmem>>, vector<27x8xbf16>
    %cst = arith.constant dense<0.000000e+00> : vector<48x8xf32>
    %6 = tpu.matmul %4, %5, %cst {dimension_numbers = #tpu.dot_dimension_numbers<[1], [0], [0], [1], [0, 0, 1, 1], [], []>} : vector<48x27xbf16>, vector<27x8xbf16>, vector<48x8xf32> -> vector<48x8xf32>
    %c0_5 = arith.constant 0 : index
    %c0_6 = arith.constant 0 : index
    %7 = vector.load %arg4[%c0_5, %c0_6] : memref<1x8xf32, #tpu.memory_space<vmem>>, vector<1x8xf32>
    %8 = vector.broadcast %7 : vector<1x8xf32> to vector<48x8xf32>
    %9 = arith.addf %6, %8 : vector<48x8xf32>
    %10 = arith.negf %9 : vector<48x8xf32>
    %11 = math.exp %10 : vector<48x8xf32>
    %cst_7 = arith.constant 1.000000e+00 : f32
    %12 = vector.broadcast %cst_7 : f32 to vector<48x8xf32>
    %13 = arith.addf %12, %11 : vector<48x8xf32>
    %14 = arith.divf %12, %13 : vector<48x8xf32>
    %15 = arith.mulf %9, %14 : vector<48x8xf32>
    %16 = arith.truncf %15 : vector<48x8xf32> to vector<48x8xbf16>
    %c0_8 = arith.constant 0 : index
    %c0_9 = arith.constant 0 : index
    %17 = vector.load %arg5[%c0_8, %c0_9] : memref<8x128xbf16, #tpu.memory_space<vmem>>, vector<8x128xbf16>
    %cst_10 = arith.constant dense<0.000000e+00> : vector<48x128xf32>
    %18 = tpu.matmul %16, %17, %cst_10 {dimension_numbers = #tpu.dot_dimension_numbers<[1], [0], [0], [1], [0, 0, 1, 1], [], []>} : vector<48x8xbf16>, vector<8x128xbf16>, vector<48x128xf32> -> vector<48x128xf32>
    %c0_11 = arith.constant 0 : index
    %c0_12 = arith.constant 0 : index
    %19 = vector.load %arg6[%c0_11, %c0_12] : memref<1x128xf32, #tpu.memory_space<vmem>>, vector<1x128xf32>
    %20 = vector.broadcast %19 : vector<1x128xf32> to vector<48x128xf32>
    %21 = arith.addf %18, %20 : vector<48x128xf32>
    %22 = arith.negf %21 : vector<48x128xf32>
    %23 = math.exp %22 : vector<48x128xf32>
    %cst_13 = arith.constant 1.000000e+00 : f32
    %24 = vector.broadcast %cst_13 : f32 to vector<48x128xf32>
    %25 = arith.addf %24, %23 : vector<48x128xf32>
    %26 = arith.divf %24, %25 : vector<48x128xf32>
    %27 = arith.mulf %21, %26 : vector<48x128xf32>
    %c0_14 = arith.constant 0 : index
    %c0_15 = arith.constant 0 : index
    %28 = vector.load %arg9[%c0_14, %c0_15] : memref<8x128xf32, #tpu.memory_space<vmem>>, vector<8x128xf32>
    %29 = vector.shape_cast %27 : vector<48x128xf32> to vector<6x8x128xf32>
    %cst_16 = arith.constant dense<0.000000e+00> : vector<8x128xf32>
    %30 = vector.multi_reduction <add>, %29, %cst_16 [0] : vector<6x8x128xf32> to vector<8x128xf32>
    %31 = arith.addf %28, %30 : vector<8x128xf32>
    %c0_17 = arith.constant 0 : index
    %c0_18 = arith.constant 0 : index
    %32 = vector.load %arg9[%c0_17, %c0_18] : memref<8x128xf32, #tpu.memory_space<vmem>>, vector<8x128xf32>
    tpu.vector_store %arg9[%c0_17, %c0_18], %31 {strides = array<i32>} : memref<8x128xf32, #tpu.memory_space<vmem>>, vector<8x128xf32>,
    %c1_i32 = arith.constant 1 : i32
    %33 = arith.cmpi eq, %arg1, %c1_i32 : i32
    %34 = arith.extui %33 : i1 to i32
    %c0_i32_19 = arith.constant 0 : i32
    %35 = arith.cmpi ne, %34, %c0_i32_19 : i32
    scf.if %35 {
      %c0_20 = arith.constant 0 : index
      %c0_21 = arith.constant 0 : index
      %36 = vector.load %arg9[%c0_20, %c0_21] : memref<8x128xf32, #tpu.memory_space<vmem>>, vector<8x128xf32>
      %cst_22 = arith.constant dense<0.000000e+00> : vector<128xf32>
      %37 = vector.multi_reduction <add>, %36, %cst_22 [0] : vector<8x128xf32> to vector<128xf32>
      %38 = vector.shape_cast %37 : vector<128xf32> to vector<1x128xf32>
      %c0_23 = arith.constant 0 : index
      %c0_24 = arith.constant 0 : index
      %39 = vector.load %arg7[%c0_23, %c0_24] : memref<1x128xf32, #tpu.memory_space<vmem>>, vector<1x128xf32>
      %40 = arith.subf %38, %39 : vector<1x128xf32>
      %cst_25 = arith.constant 1.562500e-02 : f32
      %41 = vector.broadcast %cst_25 : f32 to vector<1x128xf32>
      %42 = arith.mulf %40, %41 : vector<1x128xf32>
      %43 = vector.shape_cast %42 : vector<1x128xf32> to vector<1x1x128xf32>
      %c0_26 = arith.constant 0 : index
      %c0_27 = arith.constant 0 : index
      %c0_28 = arith.constant 0 : index
      %44 = vector.load %arg8[%c0_26, %c0_27, %c0_28] : memref<1x1x128xf32, #tpu.memory_space<vmem>>, vector<1x1x128xf32>
      tpu.vector_store %arg8[%c0_26, %c0_27, %c0_28], %43 {strides = array<i32>} : memref<1x1x128xf32, #tpu.memory_space<vmem>>, vector<1x1x128xf32>,
    } else {
    }
    return
  }
  func.func @transform_0(%arg0: i32, %arg1: i32) -> (i32, i32, i32) {
    %c0_i32 = arith.constant 0 : i32
    %c0_i32_0 = arith.constant 0 : i32
    return %arg0, %arg1, %c0_i32 : i32, i32, i32
  }
  func.func @transform_1(%arg0: i32, %arg1: i32) -> (i32, i32) {
    %c0_i32 = arith.constant 0 : i32
    %c0_i32_0 = arith.constant 0 : i32
    %c0_i32_1 = arith.constant 0 : i32
    return %c0_i32, %c0_i32_0 : i32, i32
  }
  func.func @transform_2(%arg0: i32, %arg1: i32) -> (i32, i32) {
    %c0_i32 = arith.constant 0 : i32
    %c0_i32_0 = arith.constant 0 : i32
    %c0_i32_1 = arith.constant 0 : i32
    return %c0_i32, %c0_i32_0 : i32, i32
  }
  func.func @transform_3(%arg0: i32, %arg1: i32) -> (i32, i32) {
    %c0_i32 = arith.constant 0 : i32
    %c0_i32_0 = arith.constant 0 : i32
    %c0_i32_1 = arith.constant 0 : i32
    return %c0_i32, %c0_i32_0 : i32, i32
  }
  func.func @transform_4(%arg0: i32, %arg1: i32) -> (i32, i32) {
    %c0_i32 = arith.constant 0 : i32
    %c0_i32_0 = arith.constant 0 : i32
    %c0_i32_1 = arith.constant 0 : i32
    return %c0_i32, %c0_i32_0 : i32, i32
  }
  func.func @transform_5(%arg0: i32, %arg1: i32) -> (i32, i32) {
    %c0_i32 = arith.constant 0 : i32
    %c0_i32_0 = arith.constant 0 : i32
    %c0_i32_1 = arith.constant 0 : i32
    return %c0_i32, %c0_i32_0 : i32, i32
  }
  func.func @transform_6(%arg0: i32, %arg1: i32) -> (i32, i32, i32) {
    %c0_i32 = arith.constant 0 : i32
    %c0_i32_0 = arith.constant 0 : i32
    %c0_i32_1 = arith.constant 0 : i32
    return %arg0, %c0_i32, %c0_i32_0 : i32, i32, i32
  }
}

</mosaic_0001>

<llo_original>
// kernel: tpu_custom_call.1
$region0: #{tpu_custom_call.1}
  #allocation0 [shape = 'u32[]', space=smem, size = 0x4, offset = 0x4, fixed_abs, tag = 'smem constant byte address 0x4 - core index']
  #allocation1 [shape = 'u32[144,128]{1,0:T(1,128)}', space=vmem, size = 0x12000, scoped, tag = 'internal scratch']
  #allocation2 [shape = 'f32[8,128]{1,0:T(8,128)}', space=vmem, size = 0x1000, scoped, tag = 'scratch operand']
  %s0 = inlined_call_operand.vmem [shape: bf16[2,96,27], index: 0, kind: input, shape index: {}]
  %s1 = inlined_call_operand.vmem [shape: bf16[27,8], index: 1, kind: input, shape index: {}]
  %s2 = inlined_call_operand.vmem [shape: f32[1,8], index: 2, kind: input, shape index: {}]
  %s3 = inlined_call_operand.vmem [shape: bf16[8,128], index: 3, kind: input, shape index: {}]
  %s4 = inlined_call_operand.vmem [shape: f32[1,128], index: 4, kind: input, shape index: {}]
  %s5 = inlined_call_operand.vmem [shape: f32[1,128], index: 5, kind: input, shape index: {}]
  %s6 = inlined_call_operand.hbm [shape: f32[2,1,128], index: 6, kind: output, shape index: {}]
  %s7 = sld [smem:[#allocation0]]
  $region65: #{tpu_custom_call.1} parent=0
    _
  %s9 = ssub.s32 1, %s7
  %s10 = scalar_select 0, %s9, %s7
  $region1: #{tpu_custom_call.1} parent=0
    #allocation3 [shape = 'u8[1024]{0}', space=vmem, size = 0x400, scoped, tag = 'output window, operand 0']
    #allocation4 [shape = 's32[2]{0}', space=sflag, size = 0x8, scoped, tag = 'scoped memory for tpu_custom_call.1']
    %11 = vsyncpa [#allocation4], 0
    %s12 = scalar_lea.sflag [#allocation4], 1
    %13 = vsyncpa %s12, 0
    loop: start=0, step=1, limit=6
    $region2: #{tpu_custom_call.1} parent=1 // loop_pre_header
      _
    $region3: #{tpu_custom_call.1} parent=1 // loop_header
      %s15 = sphi 0, %s19
      %p16 = scmp.ge.s32.totalorder %s15, 6
      %s22 = sphi 0, %s34
      %s23 = sphi 0, %s30
      %s24 = sphi 0, %s22
      %s25 = sphi 0, %s23
      %s26 = sphi 0, %s24
      %s27 = sphi 0, %s25
      %s39 = sphi 0, %s41
      %s42 = sphi 0, %s39
      %s43 = sphi 0, %s42
      %s59 = sphi 0, %s43
      %s63 = sphi 0, %s63
      %s65 = sphi 0, %s63
      %s66 = sphi 0, %s65
      %s80 = sphi 0, %s66
      %s84 = sphi 0, %s84
      %s86 = sphi 0, %s84
      %s87 = sphi 0, %s86
      %s101 = sphi 0, %s87
      %s105 = sphi 0, %s105
      %s107 = sphi 0, %s105
      %s108 = sphi 0, %s107
      %s122 = sphi 0, %s108
      %s126 = sphi 0, %s126
      %s128 = sphi 0, %s126
      %s129 = sphi 0, %s128
      %s143 = sphi 0, %s129
      %s147 = sphi 0, %s147
      %s149 = sphi 0, %s147
      %s150 = sphi 0, %s149
      %s164 = sphi 0, %s150
      %s170 = sphi 0, %s172
      %s173 = sphi 0, %s170
      %s174 = sphi 0, %s173
      %s190 = sphi 0, %s174
    $region4: #{tpu_custom_call.1} parent=1 // loop_header_branch
      %18 = sbr.rel (%p16) target = $region8
    $region5: #{tpu_custom_call.1} parent=1 // loop_body
      %s20 = ssub.s32 %s15, 1
      %s21 = ssub.s32 %s15, 2
      %s28 = sadd.s32 1, %s23
      %p29 = scmp.ge.s32.totalorder %s28, 2
      %s30 = scalar_select %p29, 0, %s28
      %s31 = sadd.s32 1, %s22
      %s32 = scalar_select %p29, %s31, %s22
      %p33 = scmp.ge.s32.totalorder %s32, 2
      %s34 = scalar_select %p33, 0, %s32
      %s35 = ssub.s32 %s22, %s34
      %s36 = ssub.s32 %s23, %s30
      %s37 = sor.u32 %s35, %s36
      %p38 = scmp.eq.s32.totalorder %s37, 0
      %s40 = sadd.s32 %s39, 1
      %s41 = scalar_select %p38, %s39, %s40
      %p44 = pneg %p38
      %p45 = scmp.eq.s32.totalorder %s15, 3
      %p46 = por %p44, %p45
      %p47 = scmp.ne.s32.totalorder %s39, %s42
      %p48 = scmp.eq.s32.totalorder %s15, 0
      %p49 = por %p47, %p48
      %p50 = scmp.ne.s32.totalorder %s39, %s42
      %p51 = scmp.eq.s32.totalorder %s20, 3
      %p52 = por %p50, %p51
      %p53 = scmp.ne.s32.totalorder %s42, %s43
      %p54 = scmp.eq.s32.totalorder %s20, 0
      %p55 = por %p53, %p54
      %p56 = scmp.ne.s32.totalorder %s42, %s43
      %p57 = scmp.eq.s32.totalorder %s21, 3
      %p58 = por %p56, %p57
      %p60 = scmp.ne.s32.totalorder %s43, %s59
      %p61 = scmp.eq.s32.totalorder %s21, 0
      %p62 = por %p60, %p61
      %s64 = sadd.s32 %s63, 1
      %p67 = scmp.eq.s32.totalorder %s15, 3
      %p68 = scmp.ne.s32.totalorder %s63, %s65
      %p69 = scmp.eq.s32.totalorder %s15, 0
      %p70 = por %p68, %p69
      %p71 = scmp.ne.s32.totalorder %s63, %s65
      %p72 = scmp.eq.s32.totalorder %s20, 3
      %p73 = por %p71, %p72
      %p74 = scmp.ne.s32.totalorder %s65, %s66
      %p75 = scmp.eq.s32.totalorder %s20, 0
      %p76 = por %p74, %p75
      %p77 = scmp.ne.s32.totalorder %s65, %s66
      %p78 = scmp.eq.s32.totalorder %s21, 3
      %p79 = por %p77, %p78
      %p81 = scmp.ne.s32.totalorder %s66, %s80
      %p82 = scmp.eq.s32.totalorder %s21, 0
      %p83 = por %p81, %p82
      %s85 = sadd.s32 %s84, 1
      %p88 = scmp.eq.s32.totalorder %s15, 3
      %p89 = scmp.ne.s32.totalorder %s84, %s86
      %p90 = scmp.eq.s32.totalorder %s15, 0
      %p91 = por %p89, %p90
      %p92 = scmp.ne.s32.totalorder %s84, %s86
      %p93 = scmp.eq.s32.totalorder %s20, 3
      %p94 = por %p92, %p93
      %p95 = scmp.ne.s32.totalorder %s86, %s87
      %p96 = scmp.eq.s32.totalorder %s20, 0
      %p97 = por %p95, %p96
      %p98 = scmp.ne.s32.totalorder %s86, %s87
      %p99 = scmp.eq.s32.totalorder %s21, 3
      %p100 = por %p98, %p99
      %p102 = scmp.ne.s32.totalorder %s87, %s101
      %p103 = scmp.eq.s32.totalorder %s21, 0
      %p104 = por %p102, %p103
      %s106 = sadd.s32 %s105, 1
      %p109 = scmp.eq.s32.totalorder %s15, 3
      %p110 = scmp.ne.s32.totalorder %s105, %s107
      %p111 = scmp.eq.s32.totalorder %s15, 0
      %p112 = por %p110, %p111
      %p113 = scmp.ne.s32.totalorder %s105, %s107
      %p114 = scmp.eq.s32.totalorder %s20, 3
      %p115 = por %p113, %p114
      %p116 = scmp.ne.s32.totalorder %s107, %s108
      %p117 = scmp.eq.s32.totalorder %s20, 0
      %p118 = por %p116, %p117
      %p119 = scmp.ne.s32.totalorder %s107, %s108
      %p120 = scmp.eq.s32.totalorder %s21, 3
      %p121 = por %p119, %p120
      %p123 = scmp.ne.s32.totalorder %s108, %s122
      %p124 = scmp.eq.s32.totalorder %s21, 0
      %p125 = por %p123, %p124
      %s127 = sadd.s32 %s126, 1
      %p130 = scmp.eq.s32.totalorder %s15, 3
      %p131 = scmp.ne.s32.totalorder %s126, %s128
      %p132 = scmp.eq.s32.totalorder %s15, 0
      %p133 = por %p131, %p132
      %p134 = scmp.ne.s32.totalorder %s126, %s128
      %p135 = scmp.eq.s32.totalorder %s20, 3
      %p136 = por %p134, %p135
      %p137 = scmp.ne.s32.totalorder %s128, %s129
      %p138 = scmp.eq.s32.totalorder %s20, 0
      %p139 = por %p137, %p138
      %p140 = scmp.ne.s32.totalorder %s128, %s129
      %p141 = scmp.eq.s32.totalorder %s21, 3
      %p142 = por %p140, %p141
      %p144 = scmp.ne.s32.totalorder %s129, %s143
      %p145 = scmp.eq.s32.totalorder %s21, 0
      %p146 = por %p144, %p145
      %s148 = sadd.s32 %s147, 1
      %p151 = scmp.eq.s32.totalorder %s15, 3
      %p152 = scmp.ne.s32.totalorder %s147, %s149
      %p153 = scmp.eq.s32.totalorder %s15, 0
      %p154 = por %p152, %p153
      %p155 = scmp.ne.s32.totalorder %s147, %s149
      %p156 = scmp.eq.s32.totalorder %s20, 3
      %p157 = por %p155, %p156
      %p158 = scmp.ne.s32.totalorder %s149, %s150
      %p159 = scmp.eq.s32.totalorder %s20, 0
      %p160 = por %p158, %p159
      %p161 = scmp.ne.s32.totalorder %s149, %s150
      %p162 = scmp.eq.s32.totalorder %s21, 3
      %p163 = por %p161, %p162
      %p165 = scmp.ne.s32.totalorder %s150, %s164
      %p166 = scmp.eq.s32.totalorder %s21, 0
      %p167 = por %p165, %p166
      %s168 = ssub.s32 %s22, %s34
      %p169 = scmp.eq.s32.totalorder %s168, 0
      %s171 = sadd.s32 %s170, 1
      %s172 = scalar_select %p169, %s170, %s171
      %p175 = pneg %p169
      %p176 = scmp.eq.s32.totalorder %s15, 3
      %p177 = por %p175, %p176
      %p178 = scmp.ne.s32.totalorder %s170, %s173
      %p179 = scmp.eq.s32.totalorder %s15, 0
      %p180 = por %p178, %p179
      %p181 = scmp.ne.s32.totalorder %s170, %s173
      %p182 = scmp.eq.s32.totalorder %s20, 3
      %p183 = por %p181, %p182
      %p184 = scmp.ne.s32.totalorder %s173, %s174
      %p185 = scmp.eq.s32.totalorder %s20, 0
      %p186 = por %p184, %p185
      %p187 = scmp.ne.s32.totalorder %s173, %s174
      %p188 = scmp.eq.s32.totalorder %s21, 3
      %p189 = por %p187, %p188
      %p191 = scmp.ne.s32.totalorder %s174, %s190
      %p192 = scmp.eq.s32.totalorder %s21, 0
      %p193 = por %p191, %p192
      %p194 = scmp.le.s32.totalorder 1, %s15
      %p195 = scmp.lt.s32.totalorder %s15, 5
      %p196 = pnand %p194, %p195
      %p197 = pneg %p196
      // Predicated region
      $region9: #{tpu_custom_call.1} parent=5 // pred_check
        _
      $region10: #{tpu_custom_call.1} parent=5 // pred_check_branch
        %199 = sbr.rel (%p196) target = $region12
      $region11: #{tpu_custom_call.1} parent=5 // pred_region
        %s200 = ssub.s32 %s15, 1
        // Predicated region
        $region13: #{tpu_custom_call.1} parent=11 // pred_check
          %p201 = pneg %p76
        $region14: #{tpu_custom_call.1} parent=11 // pred_check_branch
          %203 = sbr.rel (%p201) target = $region16
        $region15: #{tpu_custom_call.1} parent=11 // pred_region
          _
        $region16: #{tpu_custom_call.1} parent=11 // pred_fallthru
          _
        // Predicated region
        $region17: #{tpu_custom_call.1} parent=11 // pred_check
          %p204 = pneg %p97
        $region18: #{tpu_custom_call.1} parent=11 // pred_check_branch
          %206 = sbr.rel (%p204) target = $region20
        $region19: #{tpu_custom_call.1} parent=11 // pred_region
          _
        $region20: #{tpu_custom_call.1} parent=11 // pred_fallthru
          _
        // Predicated region
        $region21: #{tpu_custom_call.1} parent=11 // pred_check
          %p207 = pneg %p118
        $region22: #{tpu_custom_call.1} parent=11 // pred_check_branch
          %209 = sbr.rel (%p207) target = $region24
        $region23: #{tpu_custom_call.1} parent=11 // pred_region
          _
        $region24: #{tpu_custom_call.1} parent=11 // pred_fallthru
          _
        // Predicated region
        $region25: #{tpu_custom_call.1} parent=11 // pred_check
          %p210 = pneg %p139
        $region26: #{tpu_custom_call.1} parent=11 // pred_check_branch
          %212 = sbr.rel (%p210) target = $region28
        $region27: #{tpu_custom_call.1} parent=11 // pred_region
          _
        $region28: #{tpu_custom_call.1} parent=11 // pred_fallthru
          _
        // Predicated region
        $region29: #{tpu_custom_call.1} parent=11 // pred_check
          %p213 = pneg %p160
        $region30: #{tpu_custom_call.1} parent=11 // pred_check_branch
          %215 = sbr.rel (%p213) target = $region32
        $region31: #{tpu_custom_call.1} parent=11 // pred_region
          _
        $region32: #{tpu_custom_call.1} parent=11 // pred_fallthru
          _
      $region12: #{tpu_custom_call.1} parent=5 // pred_fallthru
        _
      %p216 = scmp.lt.s32.totalorder %s15, 4
      // Predicated region
      $region33: #{tpu_custom_call.1} parent=5 // pred_check
        %p217 = pneg %p216
      $region34: #{tpu_custom_call.1} parent=5 // pred_check_branch
        %219 = sbr.rel (%p217) target = $region36
      $region35: #{tpu_custom_call.1} parent=5 // pred_region
        // Predicated region
        $region37: #{tpu_custom_call.1} parent=35 // pred_check
          %p220 = pneg %p49
        $region38: #{tpu_custom_call.1} parent=35 // pred_check_branch
          %222 = sbr.rel (%p220) target = $region40
        $region39: #{tpu_custom_call.1} parent=35 // pred_region
          %s223 = smul.u32 6, %s23
          %p224 = scmp.lt.s32.totalorder %s22, 1
          %s225 = scalar_select %p224, %s22, 1
          %p226 = scmp.lt.s32.totalorder %s223, 11
          %s227 = scalar_select %p226, %s223, 11
          %s228 = smul.addr %s225, 12
          %s229 = sadd.s32 %s227, %s228
          %s230 = smul.addr %s229, 4
          %s231 = scalar_lea.vmem %s0, %s230
          %s232 = smul.u32 6, %s23
        $region40: #{tpu_custom_call.1} parent=35 // pred_fallthru
          _
      $region36: #{tpu_custom_call.1} parent=5 // pred_fallthru
        _
      %p233 = scmp.le.s32.totalorder 1, %s15
      %p234 = scmp.lt.s32.totalorder %s15, 5
      %p235 = pnand %p233, %p234
      %p236 = pneg %p235
      // Predicated region
      $region41: #{tpu_custom_call.1} parent=5 // pred_check
        _
      $region42: #{tpu_custom_call.1} parent=5 // pred_check_branch
        %238 = sbr.rel (%p235) target = $region44
      $region43: #{tpu_custom_call.1} parent=5 // pred_region
        %s239 = ssub.s32 %s15, 1
        %s240 = smul.u32 6, %s25
        %p241 = scmp.lt.s32.totalorder %s24, 1
        %s242 = scalar_select %p241, %s24, 1
        %p243 = scmp.lt.s32.totalorder %s240, 11
        %s244 = scalar_select %p243, %s240, 11
        %s245 = smul.addr %s242, 12
        %s246 = sadd.s32 %s244, %s245
        %s247 = smul.addr %s246, 4
        %s248 = scalar_lea.vmem %s0, %s247
        %p249 = pneg %p55
        %p250 = pneg %p52
        %p251 = pneg %p76
        %p252 = pneg %p73
        %p253 = pneg %p97
        %p254 = pneg %p94
        %p255 = pneg %p118
        %p256 = pneg %p115
        %p257 = pneg %p139
        %p258 = pneg %p136
        %p259 = pneg %p160
        %p260 = pneg %p157
        %p261 = pneg %p186
        %p262 = pneg %p183
        %s263 = sand.u32 %s173, 1
        %s264 = scalar_lea.sflag [#allocation4], %s263
        %s265 = sand.u32 %s173, 1
        %s266 = scalar_lea.vmem [#allocation3], %s265
        %s267 = smul.u32 6, %s25
        %p268 = scmp.lt.s32.totalorder %s24, 1
        %s269 = scalar_select %p268, %s24, 1
        %p270 = scmp.lt.s32.totalorder %s267, 11
        %s271 = scalar_select %p270, %s267, 11
        %s272 = smul.addr %s269, 12
        %s273 = sadd.s32 %s271, %s272
        %s274 = smul.addr %s273, 4
        %s275 = scalar_lea.vmem %s0, %s274
        %s276 = smul.u32 6, %s25
        %p278 = scmp.eq.s32.totalorder %s25, 0
        // Predicated region
        $region45: #{tpu_custom_call.1} parent=43 // pred_check
          %p279 = pneg %p278
        $region46: #{tpu_custom_call.1} parent=43 // pred_check_branch
          %281 = sbr.rel (%p279) target = $region48
        $region47: #{tpu_custom_call.1} parent=43 // pred_region
          %282 = vst [vmem:[#allocation2] sm:$0xff] 0.0
        $region48: #{tpu_custom_call.1} parent=43 // pred_fallthru
          _
        %v283 = vld [vmem:[%s275] sm:$0xf]
        %v284 = vld [vmem:[%s275 + $0x4] sm:$0xf]
        %v285 = vld [vmem:[%s275 + $0x8] sm:$0xf]
        %v286 = vld [vmem:[%s275 + $0xc] sm:$0xf]
        %v287 = vld [vmem:[%s275 + $0x10] sm:$0xf]
        %v288 = vld [vmem:[%s275 + $0x14] sm:$0xf]
        %v289 = vld [vmem:[%s1] sm:$0xf]
        %v290 = vld [vmem:[%s1 + $0x4] sm:$0xf]
        %v291 = vld [vmem:[%s1 + $0x8] sm:$0xf]
        %v292 = vld [vmem:[%s1 + $0xc] sm:$0x3]
        %v293 = vld [vmem:[%s2] sm:$0x1]
        %v295 = vlaneseq
        %v296 = vshrl.u32 %v295, 7
        %v297 = vsub.s32 0, %v296
        %v298 = vrot.slane %v293, %v297
        %v306 = vunpack.c.l.b16 %v283
        %v307 = vunpack.c.l.b16 %v284
        %v308 = vunpack.c.l.b16 %v285
        %v309 = vunpack.c.l.b16 %v286
        %v310 = vunpack.c.l.b16 %v287
        %v311 = vunpack.c.l.b16 %v288
        %v312 = vpack.c.b16 %v307, %v306
        %v313 = vpack.c.b16 %v309, %v308
        %v314 = vpack.c.b16 %v311, %v310
        %v319 = vunpack.c.l.b16 %v289
        %v320 = vunpack.c.l.b16 %v290
        %v321 = vunpack.c.l.b16 %v291
        %v322 = vunpack.c.l.b16 %v292
        %v323 = vpack.c.b16 %v320, %v319
        %v324 = vpack.c.b16 %v322, %v321
        %vm326 = vcmask 220160
        %v328 = vsel %vm326, %v312, 0
        %v331 = vsel %vm326, %v313, 0
        %v334 = vsel %vm326, %v314, 0
        %vm336 = vcmask 1044480
        %vm337 = vcmask 1045504
        %v338 = vsel %vm336, 4294967295, 65535
        %v339 = vsel %vm337, %v338, 0
        %v341 = vand.u32 %v324, %v339
        %343 = vmatprep.subr.bf16.mxu0 0
        %344 = vmatpush1.bf16.msra.mxu0 %v323
        %345 = vmatprep.subr.bf16.mxu0 0
        %346 = vmatpush1.bf16.msra.mxu0 %v341
        %347 = vmatprep.subr.bf16.mxu0 0
        %348 = vmatpush1.bf16.msra.mxu0 0
        %349 = vmatprep.subr.bf16.mxu0 0
        %350 = vmatpush1.bf16.msra.mxu0 0
        %351 = vmatprep.subr.bf16.mxu0 0
        %352 = vmatpush1.bf16.msra.mxu0 0
        %353 = vmatprep.subr.bf16.mxu0 0
        %354 = vmatpush1.bf16.msra.mxu0 0
        %355 = vmatprep.subr.bf16.mxu0 0
        %356 = vmatpush1.bf16.msra.mxu0 0
        %357 = vmatprep.subr.bf16.mxu0 0
        %358 = vmatpush1.bf16.msra.mxu0 0
        %359 = vmatprep.subr.bf16.mxu0 0
        %360 = vmatpush1.bf16.msra.mxu0 0
        %361 = vmatprep.subr.bf16.mxu0 0
        %362 = vmatpush1.bf16.msra.mxu0 0
        %363 = vmatprep.subr.bf16.mxu0 0
        %364 = vmatpush1.bf16.msra.mxu0 0
        %365 = vmatprep.subr.bf16.mxu0 0
        %366 = vmatpush1.bf16.msra.mxu0 0
        %367 = vmatprep.subr.bf16.mxu0 0
        %368 = vmatpush1.bf16.msra.mxu0 0
        %369 = vmatprep.subr.bf16.mxu0 0
        %370 = vmatpush1.bf16.msra.mxu0 0
        %371 = vmatprep.subr.bf16.mxu0 0
        %372 = vmatpush1.bf16.msra.mxu0 0
        %373 = vmatprep.subr.bf16.mxu0 0
        %374 = vmatpush1.bf16.msra.mxu0 0
        %375 = vmatprep.mubr.bf16.mxu0 0
        %376 = vmatmul.mubr.bf16.gmra.mrb[0].mxu0 %v328
        %v377 = vpop.f32.mrb[0].mxu0
        %v378 = vadd.f32 %v298, %v377
        %v379 = vpop.f32.mrb[0].mxu0
        %v380 = vpop.f32.mrb[0].mxu0
        %v381 = vadd.f32 %v298, %v380
        %v382 = vpop.f32.mrb[0].mxu0
        %383 = vmatprep.mubr.bf16.mxu0 0
        %384 = vmatmul.mubr.bf16.gmra.mrb[0].mxu0 %v331
        %v385 = vpop.f32.mrb[0].mxu0
        %v386 = vadd.f32 %v298, %v385
        %v387 = vpop.f32.mrb[0].mxu0
        %v388 = vpop.f32.mrb[0].mxu0
        %v389 = vadd.f32 %v298, %v388
        %v390 = vpop.f32.mrb[0].mxu0
        %391 = vmatprep.mubr.bf16.mxu0 0
        %392 = vmatmul.mubr.bf16.gmra.mrb[0].mxu0 %v334
        %v393 = vpop.f32.mrb[0].mxu0
        %v394 = vadd.f32 %v298, %v393
        %v395 = vpop.f32.mrb[0].mxu0
        %v396 = vpop.f32.mrb[0].mxu0
        %v397 = vadd.f32 %v298, %v396
        %v398 = vpop.f32.mrb[0].mxu0
        %399 = vdwg.mxu0
        %v400 = vxor.u32 %v378, 2147483648
        %v401 = vxor.u32 %v381, 2147483648
        %v402 = vxor.u32 %v386, 2147483648
        %v403 = vxor.u32 %v389, 2147483648
        %v404 = vxor.u32 %v394, 2147483648
        %v405 = vxor.u32 %v397, 2147483648
        %v406 = vmul.f32 %v400, 1.442695
        %v407 = vpow.pop %v406
        %v408 = vmul.f32 %v401, 1.442695
        %v409 = vpow.pop %v408
        %v410 = vmul.f32 %v402, 1.442695
        %v411 = vpow.pop %v410
        %v412 = vmul.f32 %v403, 1.442695
        %v413 = vpow.pop %v412
        %v414 = vmul.f32 %v404, 1.442695
        %v415 = vpow.pop %v414
        %v416 = vmul.f32 %v405, 1.442695
        %v417 = vpow.pop %v416
        %v418 = vadd.f32 %v407, 1.0
        %v419 = vadd.f32 %v409, 1.0
        %v420 = vadd.f32 %v411, 1.0
        %v421 = vadd.f32 %v413, 1.0
        %v422 = vadd.f32 %v415, 1.0
        %v423 = vadd.f32 %v417, 1.0
        %v424 = vrcp.pop %v418
        %v425 = vmul.f32 1.0, %v424
        %v426 = vrcp.pop %v419
        %v427 = vmul.f32 1.0, %v426
        %v428 = vrcp.pop %v420
        %v429 = vmul.f32 1.0, %v428
        %v430 = vrcp.pop %v421
        %v431 = vmul.f32 1.0, %v430
        %v432 = vrcp.pop %v422
        %v433 = vmul.f32 1.0, %v432
        %v434 = vrcp.pop %v423
        %v435 = vmul.f32 1.0, %v434
        %v436 = vmul.f32 %v378, %v425
        %v437 = vmul.f32 %v381, %v427
        %v438 = vmul.f32 %v386, %v429
        %v439 = vmul.f32 %v389, %v431
        %v440 = vmul.f32 %v394, %v433
        %v441 = vmul.f32 %v397, %v435
        %v442 = vpack.c.bf16 %v437, %v436
        %v443 = vpack.c.bf16 %v439, %v438
        %v444 = vpack.c.bf16 %v441, %v440
        %v445 = vld [vmem:[%s3] sm:$0xf]
        %v446 = vld [vmem:[%s4] sm:$0x1]
        %v448 = vlaneseq
        %v449 = vshrl.u32 %v448, 7
        %v450 = vsub.s32 0, %v449
        %v451 = vrot.slane %v446, %v450
        %vm453 = vcmask 64512
        %v455 = vsel %vm453, %v442, 0
        %v458 = vsel %vm453, %v443, 0
        %v461 = vsel %vm453, %v444, 0
        %vm463 = vcmask 1043456
        %v465 = vsel %vm463, %v445, 0
        %467 = vmatprep.subr.bf16.mxu0 0
        %468 = vmatpush1.bf16.msra.mxu0 %v465
        %469 = vmatprep.subr.bf16.mxu0 0
        %470 = vmatpush1.bf16.msra.mxu0 0
        %471 = vmatprep.subr.bf16.mxu0 0
        %472 = vmatpush1.bf16.msra.mxu0 0
        %473 = vmatprep.subr.bf16.mxu0 0
        %474 = vmatpush1.bf16.msra.mxu0 0
        %475 = vmatprep.subr.bf16.mxu0 0
        %476 = vmatpush1.bf16.msra.mxu0 0
        %477 = vmatprep.subr.bf16.mxu0 0
        %478 = vmatpush1.bf16.msra.mxu0 0
        %479 = vmatprep.subr.bf16.mxu0 0
        %480 = vmatpush1.bf16.msra.mxu0 0
        %481 = vmatprep.subr.bf16.mxu0 0
        %482 = vmatpush1.bf16.msra.mxu0 0
        %483 = vmatprep.subr.bf16.mxu0 0
        %484 = vmatpush1.bf16.msra.mxu0 0
        %485 = vmatprep.subr.bf16.mxu0 0
        %486 = vmatpush1.bf16.msra.mxu0 0
        %487 = vmatprep.subr.bf16.mxu0 0
        %488 = vmatpush1.bf16.msra.mxu0 0
        %489 = vmatprep.subr.bf16.mxu0 0
        %490 = vmatpush1.bf16.msra.mxu0 0
        %491 = vmatprep.subr.bf16.mxu0 0
        %492 = vmatpush1.bf16.msra.mxu0 0
        %493 = vmatprep.subr.bf16.mxu0 0
        %494 = vmatpush1.bf16.msra.mxu0 0
        %495 = vmatprep.subr.bf16.mxu0 0
        %496 = vmatpush1.bf16.msra.mxu0 0
        %497 = vmatprep.subr.bf16.mxu0 0
        %498 = vmatpush1.bf16.msra.mxu0 0
        %499 = vmatprep.mubr.bf16.mxu0 0
        %500 = vmatmul.mubr.bf16.gmra.mrb[0].mxu0 %v455
        %v501 = vpop.f32.mrb[0].mxu0
        %v502 = vadd.f32 %v451, %v501
        %v503 = vpop.f32.mrb[0].mxu0
        %v504 = vpop.f32.mrb[0].mxu0
        %v505 = vadd.f32 %v451, %v504
        %v506 = vpop.f32.mrb[0].mxu0
        %507 = vmatprep.mubr.bf16.mxu0 0
        %508 = vmatmul.mubr.bf16.gmra.mrb[0].mxu0 %v458
        %v509 = vpop.f32.mrb[0].mxu0
        %v510 = vadd.f32 %v451, %v509
        %v511 = vpop.f32.mrb[0].mxu0
        %v512 = vpop.f32.mrb[0].mxu0
        %v513 = vadd.f32 %v451, %v512
        %v514 = vpop.f32.mrb[0].mxu0
        %515 = vmatprep.mubr.bf16.mxu0 0
        %516 = vmatmul.mubr.bf16.gmra.mrb[0].mxu0 %v461
        %v517 = vpop.f32.mrb[0].mxu0
        %v518 = vadd.f32 %v451, %v517
        %v519 = vpop.f32.mrb[0].mxu0
        %v520 = vpop.f32.mrb[0].mxu0
        %v521 = vadd.f32 %v451, %v520
        %v522 = vpop.f32.mrb[0].mxu0
        %523 = vdwg.mxu0
        %v524 = vxor.u32 %v502, 2147483648
        %v525 = vxor.u32 %v505, 2147483648
        %v526 = vxor.u32 %v510, 2147483648
        %v527 = vxor.u32 %v513, 2147483648
        %v528 = vxor.u32 %v518, 2147483648
        %v529 = vxor.u32 %v521, 2147483648
        %v530 = vmul.f32 %v524, 1.442695
        %v531 = vpow.pop %v530
        %v532 = vmul.f32 %v525, 1.442695
        %v533 = vpow.pop %v532
        %v534 = vmul.f32 %v526, 1.442695
        %v535 = vpow.pop %v534
        %v536 = vmul.f32 %v527, 1.442695
        %v537 = vpow.pop %v536
        %v538 = vmul.f32 %v528, 1.442695
        %v539 = vpow.pop %v538
        %v540 = vmul.f32 %v529, 1.442695
        %v541 = vpow.pop %v540
        %v542 = vadd.f32 %v531, 1.0
        %v543 = vadd.f32 %v533, 1.0
        %v544 = vadd.f32 %v535, 1.0
        %v545 = vadd.f32 %v537, 1.0
        %v546 = vadd.f32 %v539, 1.0
        %v547 = vadd.f32 %v541, 1.0
        %v548 = vrcp.pop %v542
        %v549 = vmul.f32 1.0, %v548
        %v550 = vrcp.pop %v543
        %v551 = vmul.f32 1.0, %v550
        %v552 = vrcp.pop %v544
        %v553 = vmul.f32 1.0, %v552
        %v554 = vrcp.pop %v545
        %v555 = vmul.f32 1.0, %v554
        %v556 = vrcp.pop %v546
        %v557 = vmul.f32 1.0, %v556
        %v558 = vrcp.pop %v547
        %v559 = vmul.f32 1.0, %v558
        %v560 = vmul.f32 %v502, %v549
        %v561 = vmul.f32 %v505, %v551
        %v562 = vmul.f32 %v510, %v553
        %v563 = vmul.f32 %v513, %v555
        %v564 = vmul.f32 %v518, %v557
        %v565 = vmul.f32 %v521, %v559
        %v566 = vld [vmem:[#allocation2] sm:$0xff]
        %v567 = vadd.f32 %v560, %v561
        %v568 = vadd.f32 %v567, %v562
        %v569 = vadd.f32 %v568, %v563
        %v570 = vadd.f32 %v569, %v564
        %v571 = vadd.f32 %v570, %v565
        %v572 = vadd.f32 %v566, %v571
        %573 = vst [vmem:[#allocation2] sm:$0xff] %v572
        %p574 = scmp.eq.s32.totalorder %s25, 1
        // Predicated region
        $region49: #{tpu_custom_call.1} parent=43 // pred_check
          %p575 = pneg %p574
        $region50: #{tpu_custom_call.1} parent=43 // pred_check_branch
          %577 = sbr.rel (%p575) target = $region52
        $region51: #{tpu_custom_call.1} parent=43 // pred_region
          %v578 = vld [vmem:[#allocation2] sm:$0xff]
          %v579 = vrot.slane %v578, 4
          %v580 = vadd.f32 %v578, %v579
          %v581 = vrot.slane %v580, 2
          %v582 = vadd.f32 %v580, %v581
          %v583 = vrot.slane %v582, 1
          %v584 = vadd.f32 %v582, %v583
          %v585 = vld [vmem:[%s5] sm:$0x1]
          %v586 = vsub.f32 %v584, %v585
          %v587 = vmul.f32 %v586, 0.015625
          %588 = vst [vmem:[%s266] sm:$0x1] %v587
        $region52: #{tpu_custom_call.1} parent=43 // pred_fallthru
          _
        %s589 = sand.u32 %s173, 1
        %s590 = scalar_lea.sflag [#allocation4], %s589
        %s591 = sand.u32 %s173, 1
        %s592 = scalar_lea.vmem [#allocation3], %s591
        // Predicated region
        $region53: #{tpu_custom_call.1} parent=43 // pred_check
          %p593 = pneg %p183
        $region54: #{tpu_custom_call.1} parent=43 // pred_check_branch
          %595 = sbr.rel (%p593) target = $region56
        $region55: #{tpu_custom_call.1} parent=43 // pred_region
          %s597 = ssub.s32 16, 16
          %598 = vsyncadd %s590, %s597
          %s599 = smul.addr %s24, 16
          %s600 = scalar_lea.hbm %s6, %s599
          %s602 = sshll.u32 %s592, 4
          %s603 = int_to_ptr.vmem [resolvable:$true] %s602
          %605 = dma.vmem_to_hbm [thread:$0]  %s603, 16, %s600, %s590
        $region56: #{tpu_custom_call.1} parent=43 // pred_fallthru
          _
      $region44: #{tpu_custom_call.1} parent=5 // pred_fallthru
        _
      %p606 = scmp.le.s32.totalorder 2, %s15
      // Predicated region
      $region57: #{tpu_custom_call.1} parent=5 // pred_check
        %p607 = pneg %p606
      $region58: #{tpu_custom_call.1} parent=5 // pred_check_branch
        %609 = sbr.rel (%p607) target = $region60
      $region59: #{tpu_custom_call.1} parent=5 // pred_region
        %s610 = ssub.s32 %s15, 2
        // Predicated region
        $region61: #{tpu_custom_call.1} parent=59 // pred_check
          %p611 = pneg %p189
        $region62: #{tpu_custom_call.1} parent=59 // pred_check_branch
          %613 = sbr.rel (%p611) target = $region64
        $region63: #{tpu_custom_call.1} parent=59 // pred_region
          %s614 = sand.u32 %s174, 1
          %s615 = scalar_lea.sflag [#allocation4], %s614
          %s616 = sand.u32 %s174, 1
          %s617 = scalar_lea.vmem [#allocation3], %s616
          %618 = dma.done %s615, 16
        $region64: #{tpu_custom_call.1} parent=59 // pred_fallthru
          _
      $region60: #{tpu_custom_call.1} parent=5 // pred_fallthru
        _
    $region6: #{tpu_custom_call.1} parent=1 // loop_footer
      %s19 = sadd.s32 1, %s15
    $region7: #{tpu_custom_call.1} parent=1 // loop_footer_branch
      %14 = sbr.rel target = $region3
    $region8: #{tpu_custom_call.1} parent=1 // loop_exit
      _
    %619 = vsyncpa [#allocation4], 1
    %s620 = scalar_lea.sflag [#allocation4], 1
    %621 = vsyncpa %s620, 1

</llo_original>
